<compile_context>
chip_gen: v5e
topology: v5e:2x2
jax: 0.10.0
libtpu: 0.0.40
codegen_flags: <defaults>
</compile_context>

<pallas_src>
import functools

import jax
import jax.numpy as jnp
from jax.experimental import pallas as pl
from jax.experimental.pallas import tpu as pltpu


def _round_up(x: int, m: int) -> int:
    return ((x + m - 1) // m) * m


def _pick_max_lb() -> int:
    """Default lane-block cap per TPU generation (v5e smaller VMEM budget)."""
    try:
        kind = jax.devices()[0].device_kind.lower()
    except Exception:  # pragma: no cover - defensive
        return 512
    if "v5 lite" in kind or "v5e" in kind or "v5lite" in kind:
        return 512
    return 1024


# ----------------------------------------------------------------------------
# Pallas kernel factory:  out(J, lb) += reg(J, kb) @ v(kb, lb) over K blocks.
# ----------------------------------------------------------------------------
def _make_landmarks_kernel(kb: int, resident_reg: bool, use_acc: bool):
    def kernel(reg_ref, v_ref, o_ref, *scratch):
        k = pl.program_id(1)

        if resident_reg:
            # Full (J_pad, V_pad) regressor lives in VMEM; slice this K tile.
            start = pl.multiple_of(k * kb, kb)
            reg = reg_ref[:, pl.ds(start, kb)]
        else:
            reg = reg_ref[...]

        prod = jnp.dot(reg, v_ref[...], preferred_element_type=jnp.float32)

        if use_acc:
            acc_ref = scratch[0]

            @pl.when(k == 0)
            def _():
                acc_ref[...] = jnp.zeros_like(acc_ref)

            acc_ref[...] += prod

            @pl.when(k == pl.num_programs(1) - 1)
            def _():
                o_ref[...] = acc_ref[...].astype(o_ref.dtype)
        else:
            # f32 output: accumulate directly into the resident output block.
            @pl.when(k == 0)
            def _():
                o_ref[...] = jnp.zeros_like(o_ref)

            o_ref[...] += prod

    return kernel


# ----------------------------------------------------------------------------
# Wrapper: (N, V, C) vertices, (J, V) regressor -> (N, J, C)
# ----------------------------------------------------------------------------
@functools.partial(
    jax.jit, static_argnames=("max_lb", "max_kb", "resident_budget"))
def _regress_batched(vertices_flat, regressor, *, max_lb=None, max_kb=2048,
                     resident_budget=6 * 1024 * 1024):
    N, V, C = vertices_flat.shape
    J = regressor.shape[0]
    dtype = vertices_flat.dtype
    itemsize = jnp.dtype(dtype).itemsize

    if max_lb is None:
        max_lb = _pick_max_lb()

    # ---- fold batch into the lane dim:  (N, V, C) -> (V, N*C) --------------
    # (This transpose/pad is fused into the pallas_call input pipeline via
    #  allow_input_fusion below, avoiding standalone HBM relayout passes.)
    L = N * C
    v_folded = jnp.transpose(vertices_flat, (1, 0, 2)).reshape(V, L)

    # Lane block: multiple of 128 (lane-dense stores); prefer >=2 blocks so
    # both v7x TensorCores get work on the "parallel" axis.
    L128 = _round_up(L, 128)
    if L128 >= 256:
        lb = max(128, min(max_lb, (L128 // 2) // 128 * 128))
    else:
        lb = L128
    L_pad = _round_up(L128, lb)

    # Contraction (V) block: largest 128-multiple divisor of V128 that is
    # <= max_kb, so V is never padded up to a multiple of kb.
    V128 = _round_up(V, 128)
    m = V128 // 128
    d_best = 1
    for d in range(1, m + 1):
        if m % d == 0 and d * 128 <= max_kb:
            d_best = d
    kb = d_best * 128
    V_pad = V128

    # Sublane-aligned landmark count (8 for f32, 16 for bf16, ...).
    sub = max(8, 32 // itemsize)
    J_pad = _round_up(J, sub)

    v_folded = jnp.pad(v_folded, ((0, V_pad - V), (0, L_pad - L)))
    # Single cast of the regressor to the vertex dtype (PyTorch .to(dtype)).
    reg_p = jnp.pad(regressor.astype(dtype),
                    ((0, J_pad - J), (0, V_pad - V)))

    resident = (J_pad * V_pad * itemsize) <= resident_budget
    use_acc = jnp.dtype(dtype) != jnp.dtype(jnp.float32)

    grid = (L_pad // lb, V_pad // kb)

    if resident:
        # Regressor stays VMEM-resident: constant index_map => one DMA total.
        reg_spec = pl.BlockSpec((J_pad, V_pad), lambda n, k: (0, 0))
    else:
        reg_spec = pl.BlockSpec((J_pad, kb), lambda n, k: (0, k))

    scratch_shapes = ([pltpu.VMEM((J_pad, lb), jnp.float32)]
                      if use_acc else [])

    # HBM traffic estimate (regressor counted once if resident).
    reg_hbm = (J_pad * V_pad if resident
               else (L_pad // lb) * J_pad * V_pad) * itemsize
    cost = pl.CostEstimate(
        flops=2 * J_pad * V_pad * L_pad,
        transcendentals=0,
        bytes_accessed=reg_hbm + V_pad * L_pad * itemsize
        + J_pad * L_pad * itemsize,
    )

    # Explicit scoped-VMEM limit: actual footprint + headroom, capped so it
    # stays inside v7x's 64 MiB physical VMEM (v5e/v6e have 128 MiB).
    reg_vmem = (J_pad * V_pad if resident else J_pad * kb) * itemsize
    need = (2 * kb * lb * itemsize          # double-buffered vertex tile
            + 2 * J_pad * lb * itemsize     # double-buffered output tile
            + 2 * reg_vmem                  # regressor buffer(s)
            + (J_pad * lb * 4 if use_acc else 0))
    vmem_limit = int(min(need + (6 << 20), 48 << 20))

    out = pl.pallas_call(
        _make_landmarks_kernel(kb, resident, use_acc),
        out_shape=jax.ShapeDtypeStruct((J_pad, L_pad), dtype),
        grid_spec=pltpu.PrefetchScalarGridSpec(
            num_scalar_prefetch=0,
            grid=grid,
            in_specs=[
                reg_spec,                                      # regressor
                pl.BlockSpec((kb, lb), lambda n, k: (k, n)),   # folded verts
            ],
            out_specs=pl.BlockSpec((J_pad, lb), lambda n, k: (0, n)),
            scratch_shapes=scratch_shapes,
        ),
        compiler_params=pltpu.CompilerParams(
            dimension_semantics=("parallel", "arbitrary"),
            # Let XLA fuse the vertices transpose/reshape/pad into the
            # pallas_call input pipeline (removes standalone HBM passes).
            allow_input_fusion=[False, True],
            vmem_limit_bytes=vmem_limit,
        ),
        cost_estimate=cost,
    )(reg_p, v_folded)

    # ---- un-fold back to (N, J, C) -----------------------------------------
    out = out[:J, :L].reshape(J, N, C)
    return jnp.transpose(out, (1, 0, 2))


# ----------------------------------------------------------------------------
# LandmarksRegressorDense equivalent (regressor buffer supplied at init).
# ----------------------------------------------------------------------------
class LandmarksRegressorDense:
    def __init__(self, regressor):
        # regressor: (J, V) float32 buffer (deterministic synthetic weights
        # stand in for the .npz-loaded stacked landmark estimators).
        # TODO(synk): .npz loading / glob-based landmark key selection has no
        # Pallas equivalent; synthetic weights are used instead.
        self.regressor = jnp.asarray(regressor, dtype=jnp.float32)

    def __call__(self, vertices):
        if vertices.ndim == 2:
            # 'vc,jv->jc'
            return _regress_batched(vertices[None], self.regressor)[0]
        if vertices.ndim == 4:
            # 'btvc,jv->btjc'
            B, T, V, C = vertices.shape
            flat = vertices.reshape(B * T, V, C)
            out = _regress_batched(flat, self.regressor)
            return out.reshape(B, T, self.regressor.shape[0], C)
        # 'bvc,jv->bjc'
        return _regress_batched(vertices, self.regressor)


# ----------------------------------------------------------------------------
# MultiLandmarksRegressor equivalent: dict of regressors keyed by
# "<model_type>_<gender>". Selection is host-side / static (matching the
# PyTorch .flatten()[0].item()); pass Python ints or strings to avoid a
# device->host sync.
# ----------------------------------------------------------------------------
_MODEL_TYPES = {0: "smpl", 1: "smplx"}
_GENDERS = {0: "neutral", 1: "female", 2: "male"}


def _to_key_part(value, table):
    if isinstance(value, str):
        return value
    if isinstance(value, int):
        return table[value]
    # Array-like fallback (forces a blocking host read; prefer int / str).
    return table[int(jnp.ravel(jnp.asarray(value))[0])]


class MultiLandmarksRegressor:
    def __init__(self, config):
        # config: {key_str: {"num_landmarks": J, "num_vertices": V}}
        # TODO(synk): OmegaConf YAML config loading has no Pallas equivalent;
        # the config dict is passed directly.
        self.config = config
        self.regressors = {}
        key = jax.random.PRNGKey(42)
        for key_str in sorted(config.keys()):
            key, sub = jax.random.split(key)
            spec = config[key_str]
            reg = jax.random.normal(
                sub, (spec["num_landmarks"], spec["num_vertices"]),
                dtype=jnp.float32,
            ) * 0.05
            self.regressors[key_str] = LandmarksRegressorDense(reg)

    def get_module(self, key):
        key_str = f"{key[0]}_{key[1]}"
        if key_str not in self.config.keys():
            raise RuntimeError(f"Model type and gender requested not found {key}")
        return self.regressors[key_str]

    def __call__(self, vertices, model_type, gender):
        key = (_to_key_part(model_type, _MODEL_TYPES),
               _to_key_part(gender, _GENDERS))
        module = self.get_module(key)
        return module(vertices)


if __name__ == "__main__":
    # Small shapes: B=2, T=3, V=64 vertices, C=3 coords, J=8 landmarks.
    B, T, V, C, J = 2, 3, 64, 3, 8

    config = {
        "smpl_neutral": {"num_landmarks": J, "num_vertices": V},
        "smplx_female": {"num_landmarks": J, "num_vertices": V},
    }
    model = MultiLandmarksRegressor(config)

    key = jax.random.PRNGKey(0)
    k_v, _ = jax.random.split(key)
    vertices = jax.random.normal(k_v, (B, T, V, C), dtype=jnp.float32)

    # Static (Python-int) model_type / gender selection: no host sync.
    out = jax.block_until_ready(model(vertices, 0, 0))   # "smpl", "neutral"

    ref_reg = model.regressors["smpl_neutral"].regressor
    ref = jnp.einsum("btvc,jv->btjc", vertices, ref_reg)
    assert out.shape == (B, T, J, C), out.shape
    assert jnp.allclose(out, ref, atol=1e-4, rtol=1e-4)

    # 2D and 3D paths (array-valued selectors still supported, as in PyTorch).
    mt_arr = jnp.zeros((B,), dtype=jnp.int32)
    gd_arr = jnp.zeros((B,), dtype=jnp.int32)
    out2 = jax.block_until_ready(model(vertices[0, 0], mt_arr, gd_arr))
    assert jnp.allclose(out2, jnp.einsum("vc,jv->jc", vertices[0, 0], ref_reg),
                        atol=1e-4, rtol=1e-4)
    out3 = jax.block_until_ready(model(vertices[0], "smpl", "neutral"))
    assert jnp.allclose(out3, jnp.einsum("bvc,jv->bjc", vertices[0], ref_reg),
                        atol=1e-4, rtol=1e-4)

    # Multi-block path: >1 lane block (parallel) and >1 K block (direct
    # output accumulation, VMEM-resident regressor).
    N2, V2, C2, J2 = 80, 200, 3, 16
    k1, k2 = jax.random.split(jax.random.PRNGKey(1))
    verts2 = jax.random.normal(k1, (N2, V2, C2), dtype=jnp.float32)
    reg2 = jax.random.normal(k2, (J2, V2), dtype=jnp.float32) * 0.05
    ref4 = jnp.einsum("nvc,jv->njc", verts2, reg2)

    out4 = jax.block_until_ready(
        _regress_batched(verts2, reg2, max_lb=128, max_kb=128))
    assert out4.shape == (N2, J2, C2), out4.shape
    assert jnp.allclose(out4, ref4, atol=1e-4, rtol=1e-4)

    # Forced non-resident (per-K-tile streamed) regressor path.
    out5 = jax.block_until_ready(
        _regress_batched(verts2, reg2, max_lb=128, max_kb=128,
                         resident_budget=0))
    assert jnp.allclose(out5, ref4, atol=1e-4, rtol=1e-4)

    # bf16 path (f32 VMEM accumulator + cast-on-last-K epilogue).
    verts2_bf = verts2.astype(jnp.bfloat16)
    out6 = jax.block_until_ready(
        _regress_batched(verts2_bf, reg2, max_lb=128, max_kb=128))
    ref6 = jnp.einsum("nvc,jv->njc",
                      verts2_bf.astype(jnp.float32),
                      reg2.astype(jnp.bfloat16).astype(jnp.float32))
    assert out6.dtype == jnp.bfloat16
    assert jnp.allclose(out6.astype(jnp.float32), ref6, atol=2e-2, rtol=2e-2)

    print("KERNEL_OK")
</pallas_src>

<mosaic_0001>
module attributes {stable_mosaic.version = 11 : i64} {
  func.func @kernel(%arg0: i32, %arg1: i32, %arg2: memref<8x128xf32, #tpu.memory_space<vmem>>, %arg3: memref<128x128xf32, #tpu.memory_space<vmem>>, %arg4: memref<8x128xf32, #tpu.memory_space<vmem>>) attributes {dimension_semantics = [#tpu.dimension_semantics<parallel>, #tpu.dimension_semantics<arbitrary>], iteration_bounds = array<i64: 1, 1>, scalar_prefetch = 0 : i64, scratch_operands = 0 : i64, tpu.core_type = #tpu.core_type<tc>, window_params = [{pipeline_mode = #tpu.pipeline_mode<synchronous>, transform_indices = @transform_0, window_bounds = array<i64: 8, 128>}, {transform_indices = @transform_1, window_bounds = array<i64: 128, 128>}, {transform_indices = @transform_2, window_bounds = array<i64: 8, 128>}]} {
    %c128_i32 = arith.constant 128 : i32
    %0 = arith.muli %arg1, %c128_i32 : i32
    %1 = tpu.assume_multiple %0, 128 : i32
    %c0 = arith.constant 0 : index
    %2 = arith.index_cast %1 : i32 to index
    %3 = vector.load %arg2[%c0, %2] : memref<8x128xf32, #tpu.memory_space<vmem>>, vector<8x128xf32>
    %c0_0 = arith.constant 0 : index
    %c0_1 = arith.constant 0 : index
    %4 = vector.load %arg3[%c0_0, %c0_1] : memref<128x128xf32, #tpu.memory_space<vmem>>, vector<128x128xf32>
    %cst = arith.constant dense<0.000000e+00> : vector<8x128xf32>
    %5 = tpu.matmul %3, %4, %cst {dimension_numbers = #tpu.dot_dimension_numbers<[1], [0], [0], [1], [0, 0, 1, 1], [], []>} : vector<8x128xf32>, vector<128x128xf32>, vector<8x128xf32> -> vector<8x128xf32>
    %c0_i32 = arith.constant 0 : i32
    %6 = arith.cmpi eq, %arg1, %c0_i32 : i32
    %7 = arith.extui %6 : i1 to i32
    %c0_i32_2 = arith.constant 0 : i32
    %8 = arith.cmpi ne, %7, %c0_i32_2 : i32
    scf.if %8 {
      %cst_7 = arith.constant 0.000000e+00 : f32
      %12 = vector.broadcast %cst_7 : f32 to vector<8x128xf32>
      %c0_8 = arith.constant 0 : index
      %c0_9 = arith.constant 0 : index
      %13 = vector.load %arg4[%c0_8, %c0_9] : memref<8x128xf32, #tpu.memory_space<vmem>>, vector<8x128xf32>
      tpu.vector_store %arg4[%c0_8, %c0_9], %12 {strides = array<i32>} : memref<8x128xf32, #tpu.memory_space<vmem>>, vector<8x128xf32>,
    } else {
    }
    %c0_3 = arith.constant 0 : index
    %c0_4 = arith.constant 0 : index
    %9 = vector.load %arg4[%c0_3, %c0_4] : memref<8x128xf32, #tpu.memory_space<vmem>>, vector<8x128xf32>
    %10 = arith.addf %9, %5 : vector<8x128xf32>
    %c0_5 = arith.constant 0 : index
    %c0_6 = arith.constant 0 : index
    %11 = vector.load %arg4[%c0_5, %c0_6] : memref<8x128xf32, #tpu.memory_space<vmem>>, vector<8x128xf32>
    tpu.vector_store %arg4[%c0_5, %c0_6], %10 {strides = array<i32>} : memref<8x128xf32, #tpu.memory_space<vmem>>, vector<8x128xf32>,
    return
  }
  func.func @transform_0(%arg0: i32, %arg1: i32) -> (i32, i32) {
    %c0_i32 = arith.constant 0 : i32
    %c0_i32_0 = arith.constant 0 : i32
    %c0_i32_1 = arith.constant 0 : i32
    return %c0_i32, %c0_i32_0 : i32, i32
  }
  func.func @transform_1(%arg0: i32, %arg1: i32) -> (i32, i32) {
    %c0_i32 = arith.constant 0 : i32
    return %arg1, %arg0 : i32, i32
  }
  func.func @transform_2(%arg0: i32, %arg1: i32) -> (i32, i32) {
    %c0_i32 = arith.constant 0 : i32
    %c0_i32_0 = arith.constant 0 : i32
    return %c0_i32, %arg0 : i32, i32
  }
}

</mosaic_0001>

<llo_original>
// kernel: _regress_batched.2
$region0: #{_regress_batched.2}
  #allocation0 [shape = 'u32[]', space=smem, size = 0x4, offset = 0x4, fixed_abs, tag = 'smem constant byte address 0x4 - core index']
  #allocation1 [shape = 'u32[72,128]{1,0:T(1,128)}', space=vmem, size = 0x9000, scoped, tag = 'internal scratch']
  #allocation2 [shape = 'u32[2048]{0}', space=vmem, size = 0x2000, scoped, tag = 'scoped memory for _regress_batched.2']
  #allocation3 [shape = 'u32[2048]{0}', space=vmem, size = 0x2000, scoped, tag = 'scoped memory for _regress_batched.2']
  #allocation4 [shape = 'u32[2048]{0}', space=vmem, size = 0x2000, scoped, tag = 'scoped memory for _regress_batched.2']
  #allocation5 [shape = 'u32[2048]{0}', space=vmem, size = 0x2000, scoped, tag = 'scoped memory for _regress_batched.2']
  #allocation6 [shape = 'u32[2048]{0}', space=vmem, size = 0x2000, scoped, tag = 'scoped memory for _regress_batched.2']
  %s0 = inlined_call_operand.vmem [shape: f32[8,128], index: 0, kind: input, shape index: {}]
  %s1 = inlined_call_operand.vmem [shape: f32[64,18], index: 1, kind: input, shape index: {}]
  %s2 = inlined_call_operand.<no memory space> [shape: f32[], index: 2, kind: input, shape index: {}]
  %s3 = inlined_call_operand.vmem [shape: f32[8,128], index: 3, kind: output, shape index: {}]
  %s4 = sld [smem:[#allocation0]]
  $region22: #{_regress_batched.2} parent=0
    _
  %s6 = ssub.s32 1, %s4
  %s7 = scalar_select 0, %s6, %s4
  %v8 = vstv %s2
  $region1: #{_regress_batched.2} parent=0
    #allocation7 [shape = 'u8[65536]{0}', space=vmem, size = 0x10000, dematerialized = true, scoped, tag = 'FusionAdapter Buffer %fusion.1 = f32[128,128]{1,0:T(8,128)} fusion(%param_1.1, %param_2), kind=kLoop, calls=%fused_computation.1.clone, metadata={op_name="jit(_regress_batched)/jit(_pad)/pad" stack_frame_id=10}']
    // Predicated region
    $region2: #{_regress_batched.2} parent=1 // pred_check
      _
    $region3: #{_regress_batched.2} parent=1 // pred_check_branch
      %10 = sbr.rel (0) target = $region5
    $region4: #{_regress_batched.2} parent=1 // pred_region
      _
    $region5: #{_regress_batched.2} parent=1 // pred_fallthru
      _
    // Predicated region
    $region6: #{_regress_batched.2} parent=1 // pred_check
      _
    $region7: #{_regress_batched.2} parent=1 // pred_check_branch
      %12 = sbr.rel (0) target = $region9
    $region8: #{_regress_batched.2} parent=1 // pred_region
      _
    $region9: #{_regress_batched.2} parent=1 // pred_fallthru
      _
    %v13 = vld [vmem:[%s1] sm:$0xff]
    %v14 = vlaneseq
    %v15 = vand.u32 %v14, 127
    %vm17 = vcmp.lt.s32.totalorder %v15, 18
    %v18 = vsel %vm17, %v13, %v8
    %s20 = ssub.s32 256, 1
    %21 = vst [vmem:[#allocation7] sm:%s20] %v18
    %s22 = scalar_lea.vmem %s1, 8
    %v23 = vld [vmem:[%s22] sm:$0xff]
    %v24 = vlaneseq
    %v25 = vand.u32 %v24, 127
    %vm27 = vcmp.lt.s32.totalorder %v25, 18
    %v28 = vsel %vm27, %v23, %v8
    %s29 = scalar_lea.vmem [#allocation7], 8
    %s31 = ssub.s32 256, 1
    %32 = vst [vmem:[%s29] sm:%s31] %v28
    %s33 = scalar_lea.vmem %s1, 16
    %v34 = vld [vmem:[%s33] sm:$0xff]
    %v35 = vlaneseq
    %v36 = vand.u32 %v35, 127
    %vm38 = vcmp.lt.s32.totalorder %v36, 18
    %v39 = vsel %vm38, %v34, %v8
    %s40 = scalar_lea.vmem [#allocation7], 16
    %s42 = ssub.s32 256, 1
    %43 = vst [vmem:[%s40] sm:%s42] %v39
    %s44 = scalar_lea.vmem %s1, 24
    %v45 = vld [vmem:[%s44] sm:$0xff]
    %v46 = vlaneseq
    %v47 = vand.u32 %v46, 127
    %vm49 = vcmp.lt.s32.totalorder %v47, 18
    %v50 = vsel %vm49, %v45, %v8
    %s51 = scalar_lea.vmem [#allocation7], 24
    %s53 = ssub.s32 256, 1
    %54 = vst [vmem:[%s51] sm:%s53] %v50
    %s55 = scalar_lea.vmem %s1, 32
    %v56 = vld [vmem:[%s55] sm:$0xff]
    %v57 = vlaneseq
    %v58 = vand.u32 %v57, 127
    %vm60 = vcmp.lt.s32.totalorder %v58, 18
    %v61 = vsel %vm60, %v56, %v8
    %s62 = scalar_lea.vmem [#allocation7], 32
    %s64 = ssub.s32 256, 1
    %65 = vst [vmem:[%s62] sm:%s64] %v61
    %s66 = scalar_lea.vmem %s1, 40
    %v67 = vld [vmem:[%s66] sm:$0xff]
    %v68 = vlaneseq
    %v69 = vand.u32 %v68, 127
    %vm71 = vcmp.lt.s32.totalorder %v69, 18
    %v72 = vsel %vm71, %v67, %v8
    %s73 = scalar_lea.vmem [#allocation7], 40
    %s75 = ssub.s32 256, 1
    %76 = vst [vmem:[%s73] sm:%s75] %v72
    %s77 = scalar_lea.vmem %s1, 48
    %v78 = vld [vmem:[%s77] sm:$0xff]
    %v79 = vlaneseq
    %v80 = vand.u32 %v79, 127
    %vm82 = vcmp.lt.s32.totalorder %v80, 18
    %v83 = vsel %vm82, %v78, %v8
    %s84 = scalar_lea.vmem [#allocation7], 48
    %s86 = ssub.s32 256, 1
    %87 = vst [vmem:[%s84] sm:%s86] %v83
    %s88 = scalar_lea.vmem %s1, 56
    %v89 = vld [vmem:[%s88] sm:$0xff]
    %v90 = vlaneseq
    %v91 = vand.u32 %v90, 127
    %vm93 = vcmp.lt.s32.totalorder %v91, 18
    %v94 = vsel %vm93, %v89, %v8
    %s95 = scalar_lea.vmem [#allocation7], 56
    %s97 = ssub.s32 256, 1
    %98 = vst [vmem:[%s95] sm:%s97] %v94
    %s99 = scalar_lea.vmem [#allocation7], 64
    %s101 = ssub.s32 256, 1
    %102 = vst [vmem:[%s99] sm:%s101] %v8
    %s103 = scalar_lea.vmem [#allocation7], 72
    %s105 = ssub.s32 256, 1
    %106 = vst [vmem:[%s103] sm:%s105] %v8
    %s107 = scalar_lea.vmem [#allocation7], 80
    %s109 = ssub.s32 256, 1
    %110 = vst [vmem:[%s107] sm:%s109] %v8
    %s111 = scalar_lea.vmem [#allocation7], 88
    %s113 = ssub.s32 256, 1
    %114 = vst [vmem:[%s111] sm:%s113] %v8
    %s115 = scalar_lea.vmem [#allocation7], 96
    %s117 = ssub.s32 256, 1
    %118 = vst [vmem:[%s115] sm:%s117] %v8
    %s119 = scalar_lea.vmem [#allocation7], 104
    %s121 = ssub.s32 256, 1
    %122 = vst [vmem:[%s119] sm:%s121] %v8
    %s123 = scalar_lea.vmem [#allocation7], 112
    %s125 = ssub.s32 256, 1
    %126 = vst [vmem:[%s123] sm:%s125] %v8
    %s127 = scalar_lea.vmem [#allocation7], 120
    %s129 = ssub.s32 256, 1
    %130 = vst [vmem:[%s127] sm:%s129] %v8
    %s131 = smul.u32 0, 128
    %s132 = sshra.s32 %s131, 7
    %s133 = sand.u32 %s131, 127
    %s134 = scalar_lea.vmem %s0, %s132
    %v135 = vld [vmem:[%s134] sm:$0xff]
    %v136 = vld [vmem:[#allocation7] sm:$0xff]
    %v137 = vld [vmem:[#allocation7 + $0x8] sm:$0xff]
    %v138 = vld [vmem:[#allocation7 + $0x10] sm:$0xff]
    %v139 = vld [vmem:[#allocation7 + $0x18] sm:$0xff]
    %v140 = vld [vmem:[#allocation7 + $0x20] sm:$0xff]
    %v141 = vld [vmem:[#allocation7 + $0x28] sm:$0xff]
    %v142 = vld [vmem:[#allocation7 + $0x30] sm:$0xff]
    %v143 = vld [vmem:[#allocation7 + $0x38] sm:$0xff]
    %v144 = vld [vmem:[#allocation7 + $0x40] sm:$0xff]
    %v145 = vld [vmem:[#allocation7 + $0x48] sm:$0xff]
    %v146 = vld [vmem:[#allocation7 + $0x50] sm:$0xff]
    %v147 = vld [vmem:[#allocation7 + $0x58] sm:$0xff]
    %v148 = vld [vmem:[#allocation7 + $0x60] sm:$0xff]
    %v149 = vld [vmem:[#allocation7 + $0x68] sm:$0xff]
    %v150 = vld [vmem:[#allocation7 + $0x70] sm:$0xff]
    %v151 = vld [vmem:[#allocation7 + $0x78] sm:$0xff]
    %152 = vmatpush.msra.mxu0 %v151
    %153 = vmatpush.msra.mxu0 %v150
    %154 = vmatpush.msra.mxu0 %v149
    %155 = vmatpush.msra.mxu0 %v148
    %156 = vmatpush.msra.mxu0 %v147
    %157 = vmatpush.msra.mxu0 %v146
    %158 = vmatpush.msra.mxu0 %v145
    %159 = vmatpush.msra.mxu0 %v144
    %160 = vmatpush.msra.mxu0 %v143
    %161 = vmatpush.msra.mxu0 %v142
    %162 = vmatpush.msra.mxu0 %v141
    %163 = vmatpush.msra.mxu0 %v140
    %164 = vmatpush.msra.mxu0 %v139
    %165 = vmatpush.msra.mxu0 %v138
    %166 = vmatpush.msra.mxu0 %v137
    %167 = vmatpush.msra.mxu0 %v136
    %168 = vmatmul.f32.gmra.mxu0 %v135
    %v169 = vpop.f32.mrf.mxu0
    %v170 = vadd.f32 0.0, %v169
    %171 = vdwg.mxu0
    %p172 = scmp.eq.s32.totalorder 0, 0
    // Predicated region
    $region10: #{_regress_batched.2} parent=1 // pred_check
      %p173 = pneg %p172
    $region11: #{_regress_batched.2} parent=1 // pred_check_branch
      %175 = sbr.rel (%p173) target = $region13
    $region12: #{_regress_batched.2} parent=1 // pred_region
      %176 = vst [vmem:[%s3] sm:$0xff] 0.0
    $region13: #{_regress_batched.2} parent=1 // pred_fallthru
      _
    %v177 = vld [vmem:[%s3] sm:$0xff]
    %v178 = vadd.f32 %v177, %v170
    %179 = vst [vmem:[%s3] sm:$0xff] %v178
    // Predicated region
    $region14: #{_regress_batched.2} parent=1 // pred_check
      _
    $region15: #{_regress_batched.2} parent=1 // pred_check_branch
      %181 = sbr.rel (0) target = $region17
    $region16: #{_regress_batched.2} parent=1 // pred_region
      _
    $region17: #{_regress_batched.2} parent=1 // pred_fallthru
      _
    // Predicated region
    $region18: #{_regress_batched.2} parent=1 // pred_check
      _
    $region19: #{_regress_batched.2} parent=1 // pred_check_branch
      %183 = sbr.rel (0) target = $region21
    $region20: #{_regress_batched.2} parent=1 // pred_region
      _
    $region21: #{_regress_batched.2} parent=1 // pred_fallthru
      _

</llo_original>
